<compile_context>
chip_gen: v6e
topology: v6e:2x2x1
jax: 0.10.0
libtpu: 0.0.40
codegen_flags: <defaults>
</compile_context>

<pallas_src>
import jax
import jax.numpy as jnp
from jax.experimental import pallas as pl
from jax.experimental.pallas import tpu as pltpu


def _round_up(n, m):
    return ((n + m - 1) // m) * m


def mlp_kernel(xt_ref, w1t_ref, b1_ref, w2t_ref, b2_ref, w3_ref, b3_ref, o_ref):
    # One batch tile, feature-major: x^T is (10, TM) with batch on the lane axis.
    xt = xt_ref[...]                                             # (10, TM) bf16

    # fc1^T: (256,10) @ (10,TM) on the MXU — bf16 operands, f32 accumulation.
    h1 = jnp.dot(w1t_ref[...], xt,
                 preferred_element_type=jnp.float32) + b1_ref[...]
    # Sigmoid as a single transcendental (tanh) instead of exp + reciprocal.
    # Kept in f32 so v5e (no bf16 VPU/EUP) does not regress.
    h1 = 0.5 * (1.0 + jnp.tanh(0.5 * h1))                        # f32 (EUP)

    # fc2^T: (256,256) @ (256,TM) — the FLOP-dominant matmul, bf16 operands.
    h2 = jnp.dot(w2t_ref[...], h1.astype(jnp.bfloat16),
                 preferred_element_type=jnp.float32) + b2_ref[...]
    h2 = jnp.maximum(h2, 0.0)                                    # f32 (VPU)

    # fc3 (256 -> 1): N=1 matmul wastes the MXU. In the transposed layout this
    # is a VPU multiply by the broadcast w3 column plus a sublane-axis
    # reduction (mostly vreg adds), producing a lane-dense (1, TM) output row.
    o_ref[...] = (jnp.sum(h2 * w3_ref[...], axis=0, keepdims=True)
                  + b3_ref[0, 0])


def mlp_base_forward(x, w1, b1, w2, b2, w3, b3, *, tm=4096):
    """x: (B, 10) f32. Weights stored (in, out), i.e. y = x @ W + b. Returns (B, 1) f32."""
    B, F = x.shape
    H = w1.shape[1]

    # Transposed / feature-major operands (layout plumbing outside the kernel).
    w1t = w1.T.astype(jnp.bfloat16)                   # (H, F)   MXU operand
    w2t = w2.T.astype(jnp.bfloat16)                   # (H, H)   MXU operand
    b1c = b1.reshape(H, 1).astype(jnp.float32)        # broadcast over lanes (batch)
    b2c = b2.reshape(H, 1).astype(jnp.float32)
    w3c = w3.reshape(H, 1).astype(jnp.float32)        # fc3 column for the VPU path
    b3s = b3.reshape(1, 1).astype(jnp.float32)        # scalar -> SMEM

    # Tile selection: collapse small batches to ONE grid step (per-step overhead
    # ~0.35 us dwarfs the per-tile matmul); for large batches use an even number
    # of tiles so the "parallel" batch axis splits evenly across v7x's 2 TCs.
    # TM must be a multiple of 128 (lane granularity of the lane-dense blocks).
    if B <= tm:
        tm_eff = max(128, _round_up(B, 128))
        n_tiles = 1
    else:
        n_tiles = max(2, pl.cdiv(B, tm))
        if n_tiles % 2:
            n_tiles += 1
        tm_eff = _round_up(pl.cdiv(B, n_tiles), 128)
    Bp = tm_eff * n_tiles

    xp = x if Bp == B else jnp.pad(x, ((0, Bp - B), (0, 0)))
    xt = xp.T.astype(jnp.bfloat16)                    # (F, Bp), batch on lanes

    resident = lambda shape: pl.BlockSpec(shape, lambda i: (0, 0))

    flops = 2 * Bp * (F * H + H * H + H)
    bytes_accessed = (
        Bp * F * 2 + Bp * 4                           # bf16 x in, f32 out (padded Bp)
        + w1t.size * 2 + w2t.size * 2                 # bf16 weights
        + (b1c.size + b2c.size + w3c.size + 1) * 4    # f32 biases + w3 column
    )

    out = pl.pallas_call(
        mlp_kernel,
        out_shape=jax.ShapeDtypeStruct((1, Bp), jnp.float32),
        grid=(n_tiles,),
        in_specs=[
            pl.BlockSpec((F, tm_eff), lambda i: (0, i)),         # x^T: batch-tiled on lanes
            resident(w1t.shape),                                 # weights VMEM-resident
            resident(b1c.shape),
            resident(w2t.shape),
            resident(b2c.shape),
            resident(w3c.shape),
            pl.BlockSpec(memory_space=pltpu.MemorySpace.SMEM),   # b3 scalar
        ],
        out_specs=pl.BlockSpec((1, tm_eff), lambda i: (0, i)),   # lane-dense output row
        compiler_params=pltpu.CompilerParams(
            dimension_semantics=("parallel",),                   # v7x: shard tiles over 2 TCs
            vmem_limit_bytes=48 * 1024 * 1024,                   # room for TM=4096, < v7x 64 MiB
        ),
        cost_estimate=pl.CostEstimate(
            flops=flops,
            transcendentals=Bp * H,                              # one tanh per fc1 element
            bytes_accessed=bytes_accessed,
        ),
    )(xt, w1t, b1c, w2t, b2c, w3c, b3s)

    return out[0, :B].reshape(B, 1)


def init_params(key):
    # Deterministic init mimicking PyTorch's default Linear init:
    # uniform(-1/sqrt(fan_in), 1/sqrt(fan_in)). Weights stored as (in, out).
    def linear(key, fan_in, fan_out):
        kw, kb = jax.random.split(key)
        bound = 1.0 / jnp.sqrt(jnp.float32(fan_in))
        w = jax.random.uniform(
            kw, (fan_in, fan_out), jnp.float32, minval=-bound, maxval=bound
        )
        b = jax.random.uniform(
            kb, (1, fan_out), jnp.float32, minval=-bound, maxval=bound
        )
        return w, b

    k1, k2, k3 = jax.random.split(key, 3)
    w1, b1 = linear(k1, 10, 256)
    w2, b2 = linear(k2, 256, 256)
    w3, b3 = linear(k3, 256, 1)
    return w1, b1, w2, b2, w3, b3


def reference_forward(x, w1, b1, w2, b2, w3, b3):
    h1 = jax.nn.sigmoid(x @ w1 + b1)
    h2 = jnp.maximum(h1 @ w2 + b2, 0.0)
    return h2 @ w3 + b3


if __name__ == "__main__":
    key = jax.random.PRNGKey(0)
    k_params, k_x1, k_x2 = jax.random.split(key, 3)

    params = init_params(k_params)

    # Small batch -> single grid step (tile collapses to one 128-lane block).
    B1 = 8
    x1 = jax.random.normal(k_x1, (B1, 10), jnp.float32)
    out1 = jax.block_until_ready(mlp_base_forward(x1, *params))
    ref1 = reference_forward(x1, *params)
    assert out1.shape == (B1, 1)
    # bf16 MXU operands with f32 accumulation -> loose tolerance vs f32 ref.
    assert jnp.allclose(out1, ref1, atol=2e-2, rtol=2e-2), float(
        jnp.max(jnp.abs(out1 - ref1))
    )

    # Ragged multi-tile batch (forces the grid + even-tile + padding path by
    # overriding tm small for the test).
    B2 = 300
    x2 = jax.random.normal(k_x2, (B2, 10), jnp.float32)
    out2 = jax.block_until_ready(mlp_base_forward(x2, *params, tm=128))
    ref2 = reference_forward(x2, *params)
    assert out2.shape == (B2, 1)
    assert jnp.allclose(out2, ref2, atol=2e-2, rtol=2e-2), float(
        jnp.max(jnp.abs(out2 - ref2))
    )

    print("KERNEL_OK")
</pallas_src>

<mosaic_0001>
module attributes {stable_mosaic.version = 11 : i64} {
  func.func @mlp_kernel(%arg0: i32, %arg1: memref<10x128xbf16, #tpu.memory_space<vmem>>, %arg2: memref<256x10xbf16, #tpu.memory_space<vmem>>, %arg3: memref<256x1xf32, #tpu.memory_space<vmem>>, %arg4: memref<256x256xbf16, #tpu.memory_space<vmem>>, %arg5: memref<256x1xf32, #tpu.memory_space<vmem>>, %arg6: memref<256x1xf32, #tpu.memory_space<vmem>>, %arg7: memref<1x1xf32, #tpu.memory_space<smem>>, %arg8: memref<1x128xf32, #tpu.memory_space<vmem>>) attributes {dimension_semantics = [#tpu.dimension_semantics<parallel>], iteration_bounds = array<i64: 1>, scalar_prefetch = 0 : i64, scratch_operands = 0 : i64, tpu.core_type = #tpu.core_type<tc>, window_params = [{transform_indices = @transform_0, window_bounds = array<i64: 10, 128>}, {pipeline_mode = #tpu.pipeline_mode<synchronous>, transform_indices = @transform_1, window_bounds = array<i64: 256, 10>}, {pipeline_mode = #tpu.pipeline_mode<synchronous>, transform_indices = @transform_2, window_bounds = array<i64: 256, 1>}, {pipeline_mode = #tpu.pipeline_mode<synchronous>, transform_indices = @transform_3, window_bounds = array<i64: 256, 256>}, {pipeline_mode = #tpu.pipeline_mode<synchronous>, transform_indices = @transform_4, window_bounds = array<i64: 256, 1>}, {pipeline_mode = #tpu.pipeline_mode<synchronous>, transform_indices = @transform_5, window_bounds = array<i64: 256, 1>}, {transform_indices = @transform_6, window_bounds = array<i64: 1, 1>}, {transform_indices = @transform_7, window_bounds = array<i64: 1, 128>}]} {
    %c0 = arith.constant 0 : index
    %c0_0 = arith.constant 0 : index
    %0 = vector.load %arg1[%c0, %c0_0] : memref<10x128xbf16, #tpu.memory_space<vmem>>, vector<10x128xbf16>
    %c0_1 = arith.constant 0 : index
    %c0_2 = arith.constant 0 : index
    %1 = vector.load %arg2[%c0_1, %c0_2] : memref<256x10xbf16, #tpu.memory_space<vmem>>, vector<256x10xbf16>
    %cst = arith.constant dense<0.000000e+00> : vector<256x128xf32>
    %2 = tpu.matmul %1, %0, %cst {dimension_numbers = #tpu.dot_dimension_numbers<[1], [0], [0], [1], [0, 0, 1, 1], [], []>} : vector<256x10xbf16>, vector<10x128xbf16>, vector<256x128xf32> -> vector<256x128xf32>
    %c0_3 = arith.constant 0 : index
    %c0_4 = arith.constant 0 : index
    %3 = vector.load %arg3[%c0_3, %c0_4] : memref<256x1xf32, #tpu.memory_space<vmem>>, vector<256x1xf32>
    %4 = vector.broadcast %3 : vector<256x1xf32> to vector<256x128xf32>
    %5 = arith.addf %2, %4 : vector<256x128xf32>
    %cst_5 = arith.constant 5.000000e-01 : f32
    %6 = vector.broadcast %cst_5 : f32 to vector<256x128xf32>
    %7 = arith.mulf %6, %5 : vector<256x128xf32>
    %8 = math.tanh %7 : vector<256x128xf32>
    %cst_6 = arith.constant 1.000000e+00 : f32
    %9 = vector.broadcast %cst_6 : f32 to vector<256x128xf32>
    %10 = arith.addf %9, %8 : vector<256x128xf32>
    %cst_7 = arith.constant 5.000000e-01 : f32
    %11 = vector.broadcast %cst_7 : f32 to vector<256x128xf32>
    %12 = arith.mulf %11, %10 : vector<256x128xf32>
    %c0_8 = arith.constant 0 : index
    %c0_9 = arith.constant 0 : index
    %13 = vector.load %arg4[%c0_8, %c0_9] : memref<256x256xbf16, #tpu.memory_space<vmem>>, vector<256x256xbf16>
    %14 = arith.truncf %12 : vector<256x128xf32> to vector<256x128xbf16>
    %cst_10 = arith.constant dense<0.000000e+00> : vector<256x128xf32>
    %15 = tpu.matmul %13, %14, %cst_10 {dimension_numbers = #tpu.dot_dimension_numbers<[1], [0], [0], [1], [0, 0, 1, 1], [], []>} : vector<256x256xbf16>, vector<256x128xbf16>, vector<256x128xf32> -> vector<256x128xf32>
    %c0_11 = arith.constant 0 : index
    %c0_12 = arith.constant 0 : index
    %16 = vector.load %arg5[%c0_11, %c0_12] : memref<256x1xf32, #tpu.memory_space<vmem>>, vector<256x1xf32>
    %17 = vector.broadcast %16 : vector<256x1xf32> to vector<256x128xf32>
    %18 = arith.addf %15, %17 : vector<256x128xf32>
    %cst_13 = arith.constant 0.000000e+00 : f32
    %19 = vector.broadcast %cst_13 : f32 to vector<256x128xf32>
    %20 = arith.maximumf %18, %19 : vector<256x128xf32>
    %c0_14 = arith.constant 0 : index
    %c0_15 = arith.constant 0 : index
    %21 = vector.load %arg6[%c0_14, %c0_15] : memref<256x1xf32, #tpu.memory_space<vmem>>, vector<256x1xf32>
    %22 = vector.broadcast %21 : vector<256x1xf32> to vector<256x128xf32>
    %23 = arith.mulf %20, %22 : vector<256x128xf32>
    %cst_16 = arith.constant dense<0.000000e+00> : vector<128xf32>
    %24 = vector.multi_reduction <add>, %23, %cst_16 [0] : vector<256x128xf32> to vector<128xf32>
    %25 = vector.shape_cast %24 : vector<128xf32> to vector<1x128xf32>
    %c0_17 = arith.constant 0 : index
    %c0_18 = arith.constant 0 : index
    %26 = memref.load %arg7[%c0_17, %c0_18] : memref<1x1xf32, #tpu.memory_space<smem>>
    %27 = vector.broadcast %26 : f32 to vector<1x128xf32>
    %28 = arith.addf %25, %27 : vector<1x128xf32>
    %c0_19 = arith.constant 0 : index
    %c0_20 = arith.constant 0 : index
    %29 = vector.load %arg8[%c0_19, %c0_20] : memref<1x128xf32, #tpu.memory_space<vmem>>, vector<1x128xf32>
    tpu.vector_store %arg8[%c0_19, %c0_20], %28 {strides = array<i32>} : memref<1x128xf32, #tpu.memory_space<vmem>>, vector<1x128xf32>,
    return
  }
  func.func @transform_0(%arg0: i32) -> (i32, i32) {
    %c0_i32 = arith.constant 0 : i32
    %c0_i32_0 = arith.constant 0 : i32
    return %c0_i32, %arg0 : i32, i32
  }
  func.func @transform_1(%arg0: i32) -> (i32, i32) {
    %c0_i32 = arith.constant 0 : i32
    %c0_i32_0 = arith.constant 0 : i32
    %c0_i32_1 = arith.constant 0 : i32
    return %c0_i32, %c0_i32_0 : i32, i32
  }
  func.func @transform_2(%arg0: i32) -> (i32, i32) {
    %c0_i32 = arith.constant 0 : i32
    %c0_i32_0 = arith.constant 0 : i32
    %c0_i32_1 = arith.constant 0 : i32
    return %c0_i32, %c0_i32_0 : i32, i32
  }
  func.func @transform_3(%arg0: i32) -> (i32, i32) {
    %c0_i32 = arith.constant 0 : i32
    %c0_i32_0 = arith.constant 0 : i32
    %c0_i32_1 = arith.constant 0 : i32
    return %c0_i32, %c0_i32_0 : i32, i32
  }
  func.func @transform_4(%arg0: i32) -> (i32, i32) {
    %c0_i32 = arith.constant 0 : i32
    %c0_i32_0 = arith.constant 0 : i32
    %c0_i32_1 = arith.constant 0 : i32
    return %c0_i32, %c0_i32_0 : i32, i32
  }
  func.func @transform_5(%arg0: i32) -> (i32, i32) {
    %c0_i32 = arith.constant 0 : i32
    %c0_i32_0 = arith.constant 0 : i32
    %c0_i32_1 = arith.constant 0 : i32
    return %c0_i32, %c0_i32_0 : i32, i32
  }
  func.func @transform_6(%arg0: i32) -> (i32, i32) {
    %c0_i32 = arith.constant 0 : i32
    %c0_i32_0 = arith.constant 0 : i32
    %c0_i32_1 = arith.constant 0 : i32
    return %c0_i32, %c0_i32_0 : i32, i32
  }
  func.func @transform_7(%arg0: i32) -> (i32, i32) {
    %c0_i32 = arith.constant 0 : i32
    %c0_i32_0 = arith.constant 0 : i32
    return %c0_i32, %arg0 : i32, i32
  }
}

</mosaic_0001>

<llo_original>
// kernel: tpu_custom_call.1
$region0: #{tpu_custom_call.1}
  #allocation0 [shape = 'u32[]', space=smem, size = 0x4, offset = 0x4, fixed_abs, tag = 'smem constant byte address 0x4 - core index']
  #allocation1 [shape = 'u32[144,128]{1,0:T(1,128)}', space=vmem, size = 0x12000, scoped, tag = 'internal scratch']
  #allocation2 [shape = 'f32[1,1]{1,0:T(1,128)S(6)}', space=smem, size = 0x200, scoped, tag = 'scoped memory for tpu_custom_call.1']
  %s0 = inlined_call_operand.vmem [shape: bf16[10,128], index: 0, kind: input, shape index: {}]
  %s1 = inlined_call_operand.vmem [shape: bf16[256,10], index: 1, kind: input, shape index: {}]
  %s2 = inlined_call_operand.vmem [shape: f32[256,1], index: 2, kind: input, shape index: {}]
  %s3 = inlined_call_operand.vmem [shape: bf16[256,256], index: 3, kind: input, shape index: {}]
  %s4 = inlined_call_operand.vmem [shape: f32[256,1], index: 4, kind: input, shape index: {}]
  %s5 = inlined_call_operand.vmem [shape: f32[256,1], index: 5, kind: input, shape index: {}]
  %s6 = inlined_call_operand.<no memory space> [shape: f32[1,1], index: 6, kind: input, shape index: {}]
  %s7 = inlined_call_operand.hbm [shape: f32[1,128], index: 7, kind: output, shape index: {}]
  %s8 = sld [smem:[#allocation0]]
  $region38: #{tpu_custom_call.1} parent=0
    _
  %s10 = ssub.s32 1, %s8
  %s11 = scalar_select 0, %s10, %s8
  %12 = sst [smem:[#allocation2]] %s6
  $region1: #{tpu_custom_call.1} parent=0
    #allocation3 [shape = 'u8[512]{0}', space=vmem, size = 0x400, scoped, tag = 'output window, operand 0, single buffered']
    #allocation4 [shape = 's32[1]{0}', space=sflag, size = 0x4, scoped, tag = 'scoped memory for tpu_custom_call.1']
    %13 = vsyncpa [#allocation4], 0
    // Predicated region
    $region2: #{tpu_custom_call.1} parent=1 // pred_check
      _
    $region3: #{tpu_custom_call.1} parent=1 // pred_check_branch
      %15 = sbr.rel (0) target = $region5
    $region4: #{tpu_custom_call.1} parent=1 // pred_region
      _
    $region5: #{tpu_custom_call.1} parent=1 // pred_fallthru
      _
    // Predicated region
    $region6: #{tpu_custom_call.1} parent=1 // pred_check
      _
    $region7: #{tpu_custom_call.1} parent=1 // pred_check_branch
      %17 = sbr.rel (0) target = $region9
    $region8: #{tpu_custom_call.1} parent=1 // pred_region
      _
    $region9: #{tpu_custom_call.1} parent=1 // pred_fallthru
      _
    // Predicated region
    $region10: #{tpu_custom_call.1} parent=1 // pred_check
      _
    $region11: #{tpu_custom_call.1} parent=1 // pred_check_branch
      %19 = sbr.rel (0) target = $region13
    $region12: #{tpu_custom_call.1} parent=1 // pred_region
      _
    $region13: #{tpu_custom_call.1} parent=1 // pred_fallthru
      _
    // Predicated region
    $region14: #{tpu_custom_call.1} parent=1 // pred_check
      _
    $region15: #{tpu_custom_call.1} parent=1 // pred_check_branch
      %21 = sbr.rel (0) target = $region17
    $region16: #{tpu_custom_call.1} parent=1 // pred_region
      _
    $region17: #{tpu_custom_call.1} parent=1 // pred_fallthru
      _
    // Predicated region
    $region18: #{tpu_custom_call.1} parent=1 // pred_check
      _
    $region19: #{tpu_custom_call.1} parent=1 // pred_check_branch
      %23 = sbr.rel (0) target = $region21
    $region20: #{tpu_custom_call.1} parent=1 // pred_region
      _
    $region21: #{tpu_custom_call.1} parent=1 // pred_fallthru
      _
    // Predicated region
    $region22: #{tpu_custom_call.1} parent=1 // pred_check
      _
    $region23: #{tpu_custom_call.1} parent=1 // pred_check_branch
      %25 = sbr.rel (0) target = $region25
    $region24: #{tpu_custom_call.1} parent=1 // pred_region
      _
    $region25: #{tpu_custom_call.1} parent=1 // pred_fallthru
      _
    // Predicated region
    $region26: #{tpu_custom_call.1} parent=1 // pred_check
      _
    $region27: #{tpu_custom_call.1} parent=1 // pred_check_branch
      %27 = sbr.rel (0) target = $region29
    $region28: #{tpu_custom_call.1} parent=1 // pred_region
      _
    $region29: #{tpu_custom_call.1} parent=1 // pred_fallthru
      _
    %v29 = vld [vmem:[%s0] sm:$0xf]
    %v30 = vld [vmem:[%s0 + $0x4] sm:$0x1]
    %v31 = vld [vmem:[%s1] sm:$0xf]
    %v32 = vld [vmem:[%s1 + $0x4] sm:$0xf]
    %v33 = vld [vmem:[%s1 + $0x8] sm:$0xf]
    %v34 = vld [vmem:[%s1 + $0xc] sm:$0xf]
    %v35 = vld [vmem:[%s1 + $0x10] sm:$0xf]
    %v36 = vld [vmem:[%s1 + $0x14] sm:$0xf]
    %v37 = vld [vmem:[%s1 + $0x18] sm:$0xf]
    %v38 = vld [vmem:[%s1 + $0x1c] sm:$0xf]
    %v39 = vld [vmem:[%s1 + $0x20] sm:$0xf]
    %v40 = vld [vmem:[%s1 + $0x24] sm:$0xf]
    %v41 = vld [vmem:[%s1 + $0x28] sm:$0xf]
    %v42 = vld [vmem:[%s1 + $0x2c] sm:$0xf]
    %v43 = vld [vmem:[%s1 + $0x30] sm:$0xf]
    %v44 = vld [vmem:[%s1 + $0x34] sm:$0xf]
    %v45 = vld [vmem:[%s1 + $0x38] sm:$0xf]
    %v46 = vld [vmem:[%s1 + $0x3c] sm:$0xf]
    %v47 = vld [vmem:[%s1 + $0x40] sm:$0xf]
    %v48 = vld [vmem:[%s1 + $0x44] sm:$0xf]
    %v49 = vld [vmem:[%s1 + $0x48] sm:$0xf]
    %v50 = vld [vmem:[%s1 + $0x4c] sm:$0xf]
    %v51 = vld [vmem:[%s1 + $0x50] sm:$0xf]
    %v52 = vld [vmem:[%s1 + $0x54] sm:$0xf]
    %v53 = vld [vmem:[%s1 + $0x58] sm:$0xf]
    %v54 = vld [vmem:[%s1 + $0x5c] sm:$0xf]
    %v55 = vld [vmem:[%s1 + $0x60] sm:$0xf]
    %v56 = vld [vmem:[%s1 + $0x64] sm:$0xf]
    %v57 = vld [vmem:[%s1 + $0x68] sm:$0xf]
    %v58 = vld [vmem:[%s1 + $0x6c] sm:$0xf]
    %v59 = vld [vmem:[%s1 + $0x70] sm:$0xf]
    %v60 = vld [vmem:[%s1 + $0x74] sm:$0xf]
    %v61 = vld [vmem:[%s1 + $0x78] sm:$0xf]
    %v62 = vld [vmem:[%s1 + $0x7c] sm:$0xf]
    %v63 = vld [vmem:[%s2] sm:$0xff]
    %v64 = vld [vmem:[%s2 + $0x8] sm:$0xff]
    %v65 = vld [vmem:[%s2 + $0x10] sm:$0xff]
    %v66 = vld [vmem:[%s2 + $0x18] sm:$0xff]
    %v67 = vld [vmem:[%s2 + $0x20] sm:$0xff]
    %v68 = vld [vmem:[%s2 + $0x28] sm:$0xff]
    %v69 = vld [vmem:[%s2 + $0x30] sm:$0xff]
    %v70 = vld [vmem:[%s2 + $0x38] sm:$0xff]
    %v71 = vld [vmem:[%s2 + $0x40] sm:$0xff]
    %v72 = vld [vmem:[%s2 + $0x48] sm:$0xff]
    %v73 = vld [vmem:[%s2 + $0x50] sm:$0xff]
    %v74 = vld [vmem:[%s2 + $0x58] sm:$0xff]
    %v75 = vld [vmem:[%s2 + $0x60] sm:$0xff]
    %v76 = vld [vmem:[%s2 + $0x68] sm:$0xff]
    %v77 = vld [vmem:[%s2 + $0x70] sm:$0xff]
    %v78 = vld [vmem:[%s2 + $0x78] sm:$0xff]
    %v79 = vld [vmem:[%s2 + $0x80] sm:$0xff]
    %v80 = vld [vmem:[%s2 + $0x88] sm:$0xff]
    %v81 = vld [vmem:[%s2 + $0x90] sm:$0xff]
    %v82 = vld [vmem:[%s2 + $0x98] sm:$0xff]
    %v83 = vld [vmem:[%s2 + $0xa0] sm:$0xff]
    %v84 = vld [vmem:[%s2 + $0xa8] sm:$0xff]
    %v85 = vld [vmem:[%s2 + $0xb0] sm:$0xff]
    %v86 = vld [vmem:[%s2 + $0xb8] sm:$0xff]
    %v87 = vld [vmem:[%s2 + $0xc0] sm:$0xff]
    %v88 = vld [vmem:[%s2 + $0xc8] sm:$0xff]
    %v89 = vld [vmem:[%s2 + $0xd0] sm:$0xff]
    %v90 = vld [vmem:[%s2 + $0xd8] sm:$0xff]
    %v91 = vld [vmem:[%s2 + $0xe0] sm:$0xff]
    %v92 = vld [vmem:[%s2 + $0xe8] sm:$0xff]
    %v93 = vld [vmem:[%s2 + $0xf0] sm:$0xff]
    %v94 = vld [vmem:[%s2 + $0xf8] sm:$0xff]
    %96 = vset.pattern.permute.xlu0 0
    %97 = vperm.xlu0 %96, %v63
    %v98 = vpop.permute.xlu0 %97
    %101 = vset.pattern.permute.xlu0 0
    %102 = vperm.xlu0 %101, %v64
    %v103 = vpop.permute.xlu0 %102
    %106 = vset.pattern.permute.xlu0 0
    %107 = vperm.xlu0 %106, %v65
    %v108 = vpop.permute.xlu0 %107
    %111 = vset.pattern.permute.xlu0 0
    %112 = vperm.xlu0 %111, %v66
    %v113 = vpop.permute.xlu0 %112
    %116 = vset.pattern.permute.xlu0 0
    %117 = vperm.xlu0 %116, %v67
    %v118 = vpop.permute.xlu0 %117
    %121 = vset.pattern.permute.xlu0 0
    %122 = vperm.xlu0 %121, %v68
    %v123 = vpop.permute.xlu0 %122
    %126 = vset.pattern.permute.xlu0 0
    %127 = vperm.xlu0 %126, %v69
    %v128 = vpop.permute.xlu0 %127
    %131 = vset.pattern.permute.xlu0 0
    %132 = vperm.xlu0 %131, %v70
    %v133 = vpop.permute.xlu0 %132
    %136 = vset.pattern.permute.xlu0 0
    %137 = vperm.xlu0 %136, %v71
    %v138 = vpop.permute.xlu0 %137
    %141 = vset.pattern.permute.xlu0 0
    %142 = vperm.xlu0 %141, %v72
    %v143 = vpop.permute.xlu0 %142
    %146 = vset.pattern.permute.xlu0 0
    %147 = vperm.xlu0 %146, %v73
    %v148 = vpop.permute.xlu0 %147
    %151 = vset.pattern.permute.xlu0 0
    %152 = vperm.xlu0 %151, %v74
    %v153 = vpop.permute.xlu0 %152
    %156 = vset.pattern.permute.xlu0 0
    %157 = vperm.xlu0 %156, %v75
    %v158 = vpop.permute.xlu0 %157
    %161 = vset.pattern.permute.xlu0 0
    %162 = vperm.xlu0 %161, %v76
    %v163 = vpop.permute.xlu0 %162
    %166 = vset.pattern.permute.xlu0 0
    %167 = vperm.xlu0 %166, %v77
    %v168 = vpop.permute.xlu0 %167
    %171 = vset.pattern.permute.xlu0 0
    %172 = vperm.xlu0 %171, %v78
    %v173 = vpop.permute.xlu0 %172
    %176 = vset.pattern.permute.xlu0 0
    %177 = vperm.xlu0 %176, %v79
    %v178 = vpop.permute.xlu0 %177
    %181 = vset.pattern.permute.xlu0 0
    %182 = vperm.xlu0 %181, %v80
    %v183 = vpop.permute.xlu0 %182
    %186 = vset.pattern.permute.xlu0 0
    %187 = vperm.xlu0 %186, %v81
    %v188 = vpop.permute.xlu0 %187
    %191 = vset.pattern.permute.xlu0 0
    %192 = vperm.xlu0 %191, %v82
    %v193 = vpop.permute.xlu0 %192
    %196 = vset.pattern.permute.xlu0 0
    %197 = vperm.xlu0 %196, %v83
    %v198 = vpop.permute.xlu0 %197
    %201 = vset.pattern.permute.xlu0 0
    %202 = vperm.xlu0 %201, %v84
    %v203 = vpop.permute.xlu0 %202
    %206 = vset.pattern.permute.xlu0 0
    %207 = vperm.xlu0 %206, %v85
    %v208 = vpop.permute.xlu0 %207
    %211 = vset.pattern.permute.xlu0 0
    %212 = vperm.xlu0 %211, %v86
    %v213 = vpop.permute.xlu0 %212
    %216 = vset.pattern.permute.xlu0 0
    %217 = vperm.xlu0 %216, %v87
    %v218 = vpop.permute.xlu0 %217
    %221 = vset.pattern.permute.xlu0 0
    %222 = vperm.xlu0 %221, %v88
    %v223 = vpop.permute.xlu0 %222
    %226 = vset.pattern.permute.xlu0 0
    %227 = vperm.xlu0 %226, %v89
    %v228 = vpop.permute.xlu0 %227
    %231 = vset.pattern.permute.xlu0 0
    %232 = vperm.xlu0 %231, %v90
    %v233 = vpop.permute.xlu0 %232
    %236 = vset.pattern.permute.xlu0 0
    %237 = vperm.xlu0 %236, %v91
    %v238 = vpop.permute.xlu0 %237
    %241 = vset.pattern.permute.xlu0 0
    %242 = vperm.xlu0 %241, %v92
    %v243 = vpop.permute.xlu0 %242
    %246 = vset.pattern.permute.xlu0 0
    %247 = vperm.xlu0 %246, %v93
    %v248 = vpop.permute.xlu0 %247
    %251 = vset.pattern.permute.xlu0 0
    %252 = vperm.xlu0 %251, %v94
    %v253 = vpop.permute.xlu0 %252
    %v287 = vunpack.c.l.b16 %v31
    %v288 = vunpack.c.l.b16 %v32
    %v289 = vunpack.c.l.b16 %v33
    %v290 = vunpack.c.l.b16 %v34
    %v291 = vunpack.c.l.b16 %v35
    %v292 = vunpack.c.l.b16 %v36
    %v293 = vunpack.c.l.b16 %v37
    %v294 = vunpack.c.l.b16 %v38
    %v295 = vunpack.c.l.b16 %v39
    %v296 = vunpack.c.l.b16 %v40
    %v297 = vunpack.c.l.b16 %v41
    %v298 = vunpack.c.l.b16 %v42
    %v299 = vunpack.c.l.b16 %v43
    %v300 = vunpack.c.l.b16 %v44
    %v301 = vunpack.c.l.b16 %v45
    %v302 = vunpack.c.l.b16 %v46
    %v303 = vunpack.c.l.b16 %v47
    %v304 = vunpack.c.l.b16 %v48
    %v305 = vunpack.c.l.b16 %v49
    %v306 = vunpack.c.l.b16 %v50
    %v307 = vunpack.c.l.b16 %v51
    %v308 = vunpack.c.l.b16 %v52
    %v309 = vunpack.c.l.b16 %v53
    %v310 = vunpack.c.l.b16 %v54
    %v311 = vunpack.c.l.b16 %v55
    %v312 = vunpack.c.l.b16 %v56
    %v313 = vunpack.c.l.b16 %v57
    %v314 = vunpack.c.l.b16 %v58
    %v315 = vunpack.c.l.b16 %v59
    %v316 = vunpack.c.l.b16 %v60
    %v317 = vunpack.c.l.b16 %v61
    %v318 = vunpack.c.l.b16 %v62
    %v319 = vpack.c.b16 %v288, %v287
    %v320 = vpack.c.b16 %v290, %v289
    %v321 = vpack.c.b16 %v292, %v291
    %v322 = vpack.c.b16 %v294, %v293
    %v323 = vpack.c.b16 %v296, %v295
    %v324 = vpack.c.b16 %v298, %v297
    %v325 = vpack.c.b16 %v300, %v299
    %v326 = vpack.c.b16 %v302, %v301
    %v327 = vpack.c.b16 %v304, %v303
    %v328 = vpack.c.b16 %v306, %v305
    %v329 = vpack.c.b16 %v308, %v307
    %v330 = vpack.c.b16 %v310, %v309
    %v331 = vpack.c.b16 %v312, %v311
    %v332 = vpack.c.b16 %v314, %v313
    %v333 = vpack.c.b16 %v316, %v315
    %v334 = vpack.c.b16 %v318, %v317
    %v337 = vunpack.c.l.b16 %v29
    %v338 = vunpack.c.l.b16 %v30
    %v339 = vpack.c.b16 %v338, %v337
    %vm340 = vcmask 80896
    %v342 = vsel %vm340, %v319, 0
    %v345 = vsel %vm340, %v320, 0
    %v348 = vsel %vm340, %v321, 0
    %v351 = vsel %vm340, %v322, 0
    %v354 = vsel %vm340, %v323, 0
    %v357 = vsel %vm340, %v324, 0
    %v360 = vsel %vm340, %v325, 0
    %v363 = vsel %vm340, %v326, 0
    %v366 = vsel %vm340, %v327, 0
    %v369 = vsel %vm340, %v328, 0
    %v372 = vsel %vm340, %v329, 0
    %v375 = vsel %vm340, %v330, 0
    %v378 = vsel %vm340, %v331, 0
    %v381 = vsel %vm340, %v332, 0
    %v384 = vsel %vm340, %v333, 0
    %v387 = vsel %vm340, %v334, 0
    %vm389 = vcmask 1044480
    %v391 = vsel %vm389, %v339, 0
    %393 = vmatprep.subr.bf16.mxu0 0
    %394 = vmatpush1.bf16.msra.mxu0 0
    %395 = vmatprep.subr.bf16.mxu0 0
    %396 = vmatpush1.bf16.msra.mxu0 0
    %397 = vmatprep.subr.bf16.mxu0 0
    %398 = vmatpush1.bf16.msra.mxu0 0
    %399 = vmatprep.subr.bf16.mxu0 0
    %400 = vmatpush1.bf16.msra.mxu0 0
    %401 = vmatprep.subr.bf16.mxu0 0
    %402 = vmatpush1.bf16.msra.mxu0 0
    %403 = vmatprep.subr.bf16.mxu0 0
    %404 = vmatpush1.bf16.msra.mxu0 0
    %405 = vmatprep.subr.bf16.mxu0 0
    %406 = vmatpush1.bf16.msra.mxu0 0
    %407 = vmatprep.subr.bf16.mxu0 0
    %408 = vmatpush1.bf16.msra.mxu0 %v391
    %409 = vmatprep.subr.bf16.mxu0 0
    %410 = vmatpush2.bf16.msra.mxu0 0
    %411 = vmatprep.subr.bf16.mxu0 0
    %412 = vmatpush2.bf16.msra.mxu0 0
    %413 = vmatprep.subr.bf16.mxu0 0
    %414 = vmatpush2.bf16.msra.mxu0 0
    %415 = vmatprep.subr.bf16.mxu0 0
    %416 = vmatpush2.bf16.msra.mxu0 0
    %417 = vmatprep.subr.bf16.mxu0 0
    %418 = vmatpush2.bf16.msra.mxu0 0
    %419 = vmatprep.subr.bf16.mxu0 0
    %420 = vmatpush2.bf16.msra.mxu0 0
    %421 = vmatprep.subr.bf16.mxu0 0
    %422 = vmatpush2.bf16.msra.mxu0 0
    %423 = vmatprep.subr.bf16.mxu0 0
    %424 = vmatpush2.bf16.msra.mxu0 0
    %425 = vmatprep.mubr.bf16.mxu0 0
    %426 = vmatmul.mubr.bf16.gmra.mxu0 %v342
    %v427 = vpop.f32.mrf.mxu0
    %v428 = vadd.f32 %v98, %v427
    %v429 = vpop.f32.mrf.mxu0
    %v430 = vpop.f32.mrf.mxu0
    %v431 = vadd.f32 %v103, %v430
    %v432 = vpop.f32.mrf.mxu0
    %433 = vmatprep.mubr.bf16.mxu0 0
    %434 = vmatmul.mubr.bf16.gmra.mxu0 %v345
    %v435 = vpop.f32.mrf.mxu0
    %v436 = vadd.f32 %v108, %v435
    %v437 = vpop.f32.mrf.mxu0
    %v438 = vpop.f32.mrf.mxu0
    %v439 = vadd.f32 %v113, %v438
    %v440 = vpop.f32.mrf.mxu0
    %441 = vmatprep.mubr.bf16.mxu0 0
    %442 = vmatmul.mubr.bf16.gmra.mxu0 %v348
    %v443 = vpop.f32.mrf.mxu0
    %v444 = vadd.f32 %v118, %v443
    %v445 = vpop.f32.mrf.mxu0
    %v446 = vpop.f32.mrf.mxu0
    %v447 = vadd.f32 %v123, %v446
    %v448 = vpop.f32.mrf.mxu0
    %449 = vmatprep.mubr.bf16.mxu0 0
    %450 = vmatmul.mubr.bf16.gmra.mxu0 %v351
    %v451 = vpop.f32.mrf.mxu0
    %v452 = vadd.f32 %v128, %v451
    %v453 = vpop.f32.mrf.mxu0
    %v454 = vpop.f32.mrf.mxu0
    %v455 = vadd.f32 %v133, %v454
    %v456 = vpop.f32.mrf.mxu0
    %457 = vmatprep.mubr.bf16.mxu0 0
    %458 = vmatmul.mubr.bf16.gmra.mxu0 %v354
    %v459 = vpop.f32.mrf.mxu0
    %v460 = vadd.f32 %v138, %v459
    %v461 = vpop.f32.mrf.mxu0
    %v462 = vpop.f32.mrf.mxu0
    %v463 = vadd.f32 %v143, %v462
    %v464 = vpop.f32.mrf.mxu0
    %465 = vmatprep.mubr.bf16.mxu0 0
    %466 = vmatmul.mubr.bf16.gmra.mxu0 %v357
    %v467 = vpop.f32.mrf.mxu0
    %v468 = vadd.f32 %v148, %v467
    %v469 = vpop.f32.mrf.mxu0
    %v470 = vpop.f32.mrf.mxu0
    %v471 = vadd.f32 %v153, %v470
    %v472 = vpop.f32.mrf.mxu0
    %473 = vmatprep.mubr.bf16.mxu0 0
    %474 = vmatmul.mubr.bf16.gmra.mxu0 %v360
    %v475 = vpop.f32.mrf.mxu0
    %v476 = vadd.f32 %v158, %v475
    %v477 = vpop.f32.mrf.mxu0
    %v478 = vpop.f32.mrf.mxu0
    %v479 = vadd.f32 %v163, %v478
    %v480 = vpop.f32.mrf.mxu0
    %481 = vmatprep.mubr.bf16.mxu0 0
    %482 = vmatmul.mubr.bf16.gmra.mxu0 %v363
    %v483 = vpop.f32.mrf.mxu0
    %v484 = vadd.f32 %v168, %v483
    %v485 = vpop.f32.mrf.mxu0
    %v486 = vpop.f32.mrf.mxu0
    %v487 = vadd.f32 %v173, %v486
    %v488 = vpop.f32.mrf.mxu0
    %489 = vmatprep.mubr.bf16.mxu0 0
    %490 = vmatmul.mubr.bf16.gmra.mxu0 %v366
    %v491 = vpop.f32.mrf.mxu0
    %v492 = vadd.f32 %v178, %v491
    %v493 = vpop.f32.mrf.mxu0
    %v494 = vpop.f32.mrf.mxu0
    %v495 = vadd.f32 %v183, %v494
    %v496 = vpop.f32.mrf.mxu0
    %497 = vmatprep.mubr.bf16.mxu0 0
    %498 = vmatmul.mubr.bf16.gmra.mxu0 %v369
    %v499 = vpop.f32.mrf.mxu0
    %v500 = vadd.f32 %v188, %v499
    %v501 = vpop.f32.mrf.mxu0
    %v502 = vpop.f32.mrf.mxu0
    %v503 = vadd.f32 %v193, %v502
    %v504 = vpop.f32.mrf.mxu0
    %505 = vmatprep.mubr.bf16.mxu0 0
    %506 = vmatmul.mubr.bf16.gmra.mxu0 %v372
    %v507 = vpop.f32.mrf.mxu0
    %v508 = vadd.f32 %v198, %v507
    %v509 = vpop.f32.mrf.mxu0
    %v510 = vpop.f32.mrf.mxu0
    %v511 = vadd.f32 %v203, %v510
    %v512 = vpop.f32.mrf.mxu0
    %513 = vmatprep.mubr.bf16.mxu0 0
    %514 = vmatmul.mubr.bf16.gmra.mxu0 %v375
    %v515 = vpop.f32.mrf.mxu0
    %v516 = vadd.f32 %v208, %v515
    %v517 = vpop.f32.mrf.mxu0
    %v518 = vpop.f32.mrf.mxu0
    %v519 = vadd.f32 %v213, %v518
    %v520 = vpop.f32.mrf.mxu0
    %521 = vmatprep.mubr.bf16.mxu0 0
    %522 = vmatmul.mubr.bf16.gmra.mxu0 %v378
    %v523 = vpop.f32.mrf.mxu0
    %v524 = vadd.f32 %v218, %v523
    %v525 = vpop.f32.mrf.mxu0
    %v526 = vpop.f32.mrf.mxu0
    %v527 = vadd.f32 %v223, %v526
    %v528 = vpop.f32.mrf.mxu0
    %529 = vmatprep.mubr.bf16.mxu0 0
    %530 = vmatmul.mubr.bf16.gmra.mxu0 %v381
    %v531 = vpop.f32.mrf.mxu0
    %v532 = vadd.f32 %v228, %v531
    %v533 = vpop.f32.mrf.mxu0
    %v534 = vpop.f32.mrf.mxu0
    %v535 = vadd.f32 %v233, %v534
    %v536 = vpop.f32.mrf.mxu0
    %537 = vmatprep.mubr.bf16.mxu0 0
    %538 = vmatmul.mubr.bf16.gmra.mxu0 %v384
    %v539 = vpop.f32.mrf.mxu0
    %v540 = vadd.f32 %v238, %v539
    %v541 = vpop.f32.mrf.mxu0
    %v542 = vpop.f32.mrf.mxu0
    %v543 = vadd.f32 %v243, %v542
    %v544 = vpop.f32.mrf.mxu0
    %545 = vmatprep.mubr.bf16.mxu0 0
    %546 = vmatmul.mubr.bf16.gmra.mxu0 %v387
    %v547 = vpop.f32.mrf.mxu0
    %v548 = vadd.f32 %v248, %v547
    %v549 = vpop.f32.mrf.mxu0
    %v550 = vpop.f32.mrf.mxu0
    %v551 = vadd.f32 %v253, %v550
    %v552 = vpop.f32.mrf.mxu0
    %553 = vdwg.mxu0
    %v554 = vmul.f32 %v428, 0.5
    %v555 = vmul.f32 %v431, 0.5
    %v556 = vmul.f32 %v436, 0.5
    %v557 = vmul.f32 %v439, 0.5
    %v558 = vmul.f32 %v444, 0.5
    %v559 = vmul.f32 %v447, 0.5
    %v560 = vmul.f32 %v452, 0.5
    %v561 = vmul.f32 %v455, 0.5
    %v562 = vmul.f32 %v460, 0.5
    %v563 = vmul.f32 %v463, 0.5
    %v564 = vmul.f32 %v468, 0.5
    %v565 = vmul.f32 %v471, 0.5
    %v566 = vmul.f32 %v476, 0.5
    %v567 = vmul.f32 %v479, 0.5
    %v568 = vmul.f32 %v484, 0.5
    %v569 = vmul.f32 %v487, 0.5
    %v570 = vmul.f32 %v492, 0.5
    %v571 = vmul.f32 %v495, 0.5
    %v572 = vmul.f32 %v500, 0.5
    %v573 = vmul.f32 %v503, 0.5
    %v574 = vmul.f32 %v508, 0.5
    %v575 = vmul.f32 %v511, 0.5
    %v576 = vmul.f32 %v516, 0.5
    %v577 = vmul.f32 %v519, 0.5
    %v578 = vmul.f32 %v524, 0.5
    %v579 = vmul.f32 %v527, 0.5
    %v580 = vmul.f32 %v532, 0.5
    %v581 = vmul.f32 %v535, 0.5
    %v582 = vmul.f32 %v540, 0.5
    %v583 = vmul.f32 %v543, 0.5
    %v584 = vmul.f32 %v548, 0.5
    %v585 = vmul.f32 %v551, 0.5
    %v586 = vtanh.pop %v554
    %v587 = vtanh.pop %v555
    %v588 = vtanh.pop %v556
    %v589 = vtanh.pop %v557
    %v590 = vtanh.pop %v558
    %v591 = vtanh.pop %v559
    %v592 = vtanh.pop %v560
    %v593 = vtanh.pop %v561
    %v594 = vtanh.pop %v562
    %v595 = vtanh.pop %v563
    %v596 = vtanh.pop %v564
    %v597 = vtanh.pop %v565
    %v598 = vtanh.pop %v566
    %v599 = vtanh.pop %v567
    %v600 = vtanh.pop %v568
    %v601 = vtanh.pop %v569
    %v602 = vtanh.pop %v570
    %v603 = vtanh.pop %v571
    %v604 = vtanh.pop %v572
    %v605 = vtanh.pop %v573
    %v606 = vtanh.pop %v574
    %v607 = vtanh.pop %v575
    %v608 = vtanh.pop %v576
    %v609 = vtanh.pop %v577
    %v610 = vtanh.pop %v578
    %v611 = vtanh.pop %v579
    %v612 = vtanh.pop %v580
    %v613 = vtanh.pop %v581
    %v614 = vtanh.pop %v582
    %v615 = vtanh.pop %v583
    %v616 = vtanh.pop %v584
    %v617 = vtanh.pop %v585
    %v618 = vadd.f32 %v586, 1.0
    %v619 = vadd.f32 %v587, 1.0
    %v620 = vadd.f32 %v588, 1.0
    %v621 = vadd.f32 %v589, 1.0
    %v622 = vadd.f32 %v590, 1.0
    %v623 = vadd.f32 %v591, 1.0
    %v624 = vadd.f32 %v592, 1.0
    %v625 = vadd.f32 %v593, 1.0
    %v626 = vadd.f32 %v594, 1.0
    %v627 = vadd.f32 %v595, 1.0
    %v628 = vadd.f32 %v596, 1.0
    %v629 = vadd.f32 %v597, 1.0
    %v630 = vadd.f32 %v598, 1.0
    %v631 = vadd.f32 %v599, 1.0
    %v632 = vadd.f32 %v600, 1.0
    %v633 = vadd.f32 %v601, 1.0
    %v634 = vadd.f32 %v602, 1.0
    %v635 = vadd.f32 %v603, 1.0
    %v636 = vadd.f32 %v604, 1.0
    %v637 = vadd.f32 %v605, 1.0
    %v638 = vadd.f32 %v606, 1.0
    %v639 = vadd.f32 %v607, 1.0
    %v640 = vadd.f32 %v608, 1.0
    %v641 = vadd.f32 %v609, 1.0
    %v642 = vadd.f32 %v610, 1.0
    %v643 = vadd.f32 %v611, 1.0
    %v644 = vadd.f32 %v612, 1.0
    %v645 = vadd.f32 %v613, 1.0
    %v646 = vadd.f32 %v614, 1.0
    %v647 = vadd.f32 %v615, 1.0
    %v648 = vadd.f32 %v616, 1.0
    %v649 = vadd.f32 %v617, 1.0
    %v650 = vmul.f32 %v618, 0.5
    %v651 = vmul.f32 %v619, 0.5
    %v652 = vmul.f32 %v620, 0.5
    %v653 = vmul.f32 %v621, 0.5
    %v654 = vmul.f32 %v622, 0.5
    %v655 = vmul.f32 %v623, 0.5
    %v656 = vmul.f32 %v624, 0.5
    %v657 = vmul.f32 %v625, 0.5
    %v658 = vmul.f32 %v626, 0.5
    %v659 = vmul.f32 %v627, 0.5
    %v660 = vmul.f32 %v628, 0.5
    %v661 = vmul.f32 %v629, 0.5
    %v662 = vmul.f32 %v630, 0.5
    %v663 = vmul.f32 %v631, 0.5
    %v664 = vmul.f32 %v632, 0.5
    %v665 = vmul.f32 %v633, 0.5
    %v666 = vmul.f32 %v634, 0.5
    %v667 = vmul.f32 %v635, 0.5
    %v668 = vmul.f32 %v636, 0.5
    %v669 = vmul.f32 %v637, 0.5
    %v670 = vmul.f32 %v638, 0.5
    %v671 = vmul.f32 %v639, 0.5
    %v672 = vmul.f32 %v640, 0.5
    %v673 = vmul.f32 %v641, 0.5
    %v674 = vmul.f32 %v642, 0.5
    %v675 = vmul.f32 %v643, 0.5
    %v676 = vmul.f32 %v644, 0.5
    %v677 = vmul.f32 %v645, 0.5
    %v678 = vmul.f32 %v646, 0.5
    %v679 = vmul.f32 %v647, 0.5
    %v680 = vmul.f32 %v648, 0.5
    %v681 = vmul.f32 %v649, 0.5
    %v682 = vld [vmem:[%s3] sm:$0xff]
    %v683 = vld [vmem:[%s3 + $0x8] sm:$0xff]
    %v684 = vld [vmem:[%s3 + $0x10] sm:$0xff]
    %v685 = vld [vmem:[%s3 + $0x18] sm:$0xff]
    %v686 = vld [vmem:[%s3 + $0x20] sm:$0xff]
    %v687 = vld [vmem:[%s3 + $0x28] sm:$0xff]
    %v688 = vld [vmem:[%s3 + $0x30] sm:$0xff]
    %v689 = vld [vmem:[%s3 + $0x38] sm:$0xff]
    %v690 = vld [vmem:[%s3 + $0x40] sm:$0xff]
    %v691 = vld [vmem:[%s3 + $0x48] sm:$0xff]
    %v692 = vld [vmem:[%s3 + $0x50] sm:$0xff]
    %v693 = vld [vmem:[%s3 + $0x58] sm:$0xff]
    %v694 = vld [vmem:[%s3 + $0x60] sm:$0xff]
    %v695 = vld [vmem:[%s3 + $0x68] sm:$0xff]
    %v696 = vld [vmem:[%s3 + $0x70] sm:$0xff]
    %v697 = vld [vmem:[%s3 + $0x78] sm:$0xff]
    %v698 = vld [vmem:[%s3 + $0x80] sm:$0xff]
    %v699 = vld [vmem:[%s3 + $0x88] sm:$0xff]
    %v700 = vld [vmem:[%s3 + $0x90] sm:$0xff]
    %v701 = vld [vmem:[%s3 + $0x98] sm:$0xff]
    %v702 = vld [vmem:[%s3 + $0xa0] sm:$0xff]
    %v703 = vld [vmem:[%s3 + $0xa8] sm:$0xff]
    %v704 = vld [vmem:[%s3 + $0xb0] sm:$0xff]
    %v705 = vld [vmem:[%s3 + $0xb8] sm:$0xff]
    %v706 = vld [vmem:[%s3 + $0xc0] sm:$0xff]
    %v707 = vld [vmem:[%s3 + $0xc8] sm:$0xff]
    %v708 = vld [vmem:[%s3 + $0xd0] sm:$0xff]
    %v709 = vld [vmem:[%s3 + $0xd8] sm:$0xff]
    %v710 = vld [vmem:[%s3 + $0xe0] sm:$0xff]
    %v711 = vld [vmem:[%s3 + $0xe8] sm:$0xff]
    %v712 = vld [vmem:[%s3 + $0xf0] sm:$0xff]
    %v713 = vld [vmem:[%s3 + $0xf8] sm:$0xff]
    %v714 = vpack.c.bf16 %v651, %v650
    %v715 = vpack.c.bf16 %v653, %v652
    %v716 = vpack.c.bf16 %v655, %v654
    %v717 = vpack.c.bf16 %v657, %v656
    %v718 = vpack.c.bf16 %v659, %v658
    %v719 = vpack.c.bf16 %v661, %v660
    %v720 = vpack.c.bf16 %v663, %v662
    %v721 = vpack.c.bf16 %v665, %v664
    %v722 = vpack.c.bf16 %v667, %v666
    %v723 = vpack.c.bf16 %v669, %v668
    %v724 = vpack.c.bf16 %v671, %v670
    %v725 = vpack.c.bf16 %v673, %v672
    %v726 = vpack.c.bf16 %v675, %v674
    %v727 = vpack.c.bf16 %v677, %v676
    %v728 = vpack.c.bf16 %v679, %v678
    %v729 = vpack.c.bf16 %v681, %v680
    %v730 = vld [vmem:[%s4] sm:$0xff]
    %v731 = vld [vmem:[%s4 + $0x8] sm:$0xff]
    %v732 = vld [vmem:[%s4 + $0x10] sm:$0xff]
    %v733 = vld [vmem:[%s4 + $0x18] sm:$0xff]
    %v734 = vld [vmem:[%s4 + $0x20] sm:$0xff]
    %v735 = vld [vmem:[%s4 + $0x28] sm:$0xff]
    %v736 = vld [vmem:[%s4 + $0x30] sm:$0xff]
    %v737 = vld [vmem:[%s4 + $0x38] sm:$0xff]
    %v738 = vld [vmem:[%s4 + $0x40] sm:$0xff]
    %v739 = vld [vmem:[%s4 + $0x48] sm:$0xff]
    %v740 = vld [vmem:[%s4 + $0x50] sm:$0xff]
    %v741 = vld [vmem:[%s4 + $0x58] sm:$0xff]
    %v742 = vld [vmem:[%s4 + $0x60] sm:$0xff]
    %v743 = vld [vmem:[%s4 + $0x68] sm:$0xff]
    %v744 = vld [vmem:[%s4 + $0x70] sm:$0xff]
    %v745 = vld [vmem:[%s4 + $0x78] sm:$0xff]
    %v746 = vld [vmem:[%s4 + $0x80] sm:$0xff]
    %v747 = vld [vmem:[%s4 + $0x88] sm:$0xff]
    %v748 = vld [vmem:[%s4 + $0x90] sm:$0xff]
    %v749 = vld [vmem:[%s4 + $0x98] sm:$0xff]
    %v750 = vld [vmem:[%s4 + $0xa0] sm:$0xff]
    %v751 = vld [vmem:[%s4 + $0xa8] sm:$0xff]
    %v752 = vld [vmem:[%s4 + $0xb0] sm:$0xff]
    %v753 = vld [vmem:[%s4 + $0xb8] sm:$0xff]
    %v754 = vld [vmem:[%s4 + $0xc0] sm:$0xff]
    %v755 = vld [vmem:[%s4 + $0xc8] sm:$0xff]
    %v756 = vld [vmem:[%s4 + $0xd0] sm:$0xff]
    %v757 = vld [vmem:[%s4 + $0xd8] sm:$0xff]
    %v758 = vld [vmem:[%s4 + $0xe0] sm:$0xff]
    %v759 = vld [vmem:[%s4 + $0xe8] sm:$0xff]
    %v760 = vld [vmem:[%s4 + $0xf0] sm:$0xff]
    %v761 = vld [vmem:[%s4 + $0xf8] sm:$0xff]
    %763 = vset.pattern.permute.xlu0 0
    %764 = vperm.xlu0 %763, %v730
    %v765 = vpop.permute.xlu0 %764
    %768 = vset.pattern.permute.xlu0 0
    %769 = vperm.xlu0 %768, %v731
    %v770 = vpop.permute.xlu0 %769
    %773 = vset.pattern.permute.xlu0 0
    %774 = vperm.xlu0 %773, %v732
    %v775 = vpop.permute.xlu0 %774
    %778 = vset.pattern.permute.xlu0 0
    %779 = vperm.xlu0 %778, %v733
    %v780 = vpop.permute.xlu0 %779
    %783 = vset.pattern.permute.xlu0 0
    %784 = vperm.xlu0 %783, %v734
    %v785 = vpop.permute.xlu0 %784
    %788 = vset.pattern.permute.xlu0 0
    %789 = vperm.xlu0 %788, %v735
    %v790 = vpop.permute.xlu0 %789
    %793 = vset.pattern.permute.xlu0 0
    %794 = vperm.xlu0 %793, %v736
    %v795 = vpop.permute.xlu0 %794
    %798 = vset.pattern.permute.xlu0 0
    %799 = vperm.xlu0 %798, %v737
    %v800 = vpop.permute.xlu0 %799
    %803 = vset.pattern.permute.xlu0 0
    %804 = vperm.xlu0 %803, %v738
    %v805 = vpop.permute.xlu0 %804
    %808 = vset.pattern.permute.xlu0 0
    %809 = vperm.xlu0 %808, %v739
    %v810 = vpop.permute.xlu0 %809
    %813 = vset.pattern.permute.xlu0 0
    %814 = vperm.xlu0 %813, %v740
    %v815 = vpop.permute.xlu0 %814
    %818 = vset.pattern.permute.xlu0 0
    %819 = vperm.xlu0 %818, %v741
    %v820 = vpop.permute.xlu0 %819
    %823 = vset.pattern.permute.xlu0 0
    %824 = vperm.xlu0 %823, %v742
    %v825 = vpop.permute.xlu0 %824
    %828 = vset.pattern.permute.xlu0 0
    %829 = vperm.xlu0 %828, %v743
    %v830 = vpop.permute.xlu0 %829
    %833 = vset.pattern.permute.xlu0 0
    %834 = vperm.xlu0 %833, %v744
    %v835 = vpop.permute.xlu0 %834
    %838 = vset.pattern.permute.xlu0 0
    %839 = vperm.xlu0 %838, %v745
    %v840 = vpop.permute.xlu0 %839
    %843 = vset.pattern.permute.xlu0 0
    %844 = vperm.xlu0 %843, %v746
    %v845 = vpop.permute.xlu0 %844
    %848 = vset.pattern.permute.xlu0 0
    %849 = vperm.xlu0 %848, %v747
    %v850 = vpop.permute.xlu0 %849
    %853 = vset.pattern.permute.xlu0 0
    %854 = vperm.xlu0 %853, %v748
    %v855 = vpop.permute.xlu0 %854
    %858 = vset.pattern.permute.xlu0 0
    %859 = vperm.xlu0 %858, %v749
    %v860 = vpop.permute.xlu0 %859
    %863 = vset.pattern.permute.xlu0 0
    %864 = vperm.xlu0 %863, %v750
    %v865 = vpop.permute.xlu0 %864
    %868 = vset.pattern.permute.xlu0 0
    %869 = vperm.xlu0 %868, %v751
    %v870 = vpop.permute.xlu0 %869
    %873 = vset.pattern.permute.xlu0 0
    %874 = vperm.xlu0 %873, %v752
    %v875 = vpop.permute.xlu0 %874
    %878 = vset.pattern.permute.xlu0 0
    %879 = vperm.xlu0 %878, %v753
    %v880 = vpop.permute.xlu0 %879
    %883 = vset.pattern.permute.xlu0 0
    %884 = vperm.xlu0 %883, %v754
    %v885 = vpop.permute.xlu0 %884
    %888 = vset.pattern.permute.xlu0 0
    %889 = vperm.xlu0 %888, %v755
    %v890 = vpop.permute.xlu0 %889
    %893 = vset.pattern.permute.xlu0 0
    %894 = vperm.xlu0 %893, %v756
    %v895 = vpop.permute.xlu0 %894
    %898 = vset.pattern.permute.xlu0 0
    %899 = vperm.xlu0 %898, %v757
    %v900 = vpop.permute.xlu0 %899
    %903 = vset.pattern.permute.xlu0 0
    %904 = vperm.xlu0 %903, %v758
    %v905 = vpop.permute.xlu0 %904
    %908 = vset.pattern.permute.xlu0 0
    %909 = vperm.xlu0 %908, %v759
    %v910 = vpop.permute.xlu0 %909
    %913 = vset.pattern.permute.xlu0 0
    %914 = vperm.xlu0 %913, %v760
    %v915 = vpop.permute.xlu0 %914
    %918 = vset.pattern.permute.xlu0 0
    %919 = vperm.xlu0 %918, %v761
    %v920 = vpop.permute.xlu0 %919
    %v954 = vunpack.c.l.b16 %v682
    %v955 = vunpack.c.h.b16 %v682
    %v956 = vunpack.c.l.b16 %v683
    %v957 = vunpack.c.h.b16 %v683
    %v958 = vunpack.c.l.b16 %v684
    %v959 = vunpack.c.h.b16 %v684
    %v960 = vunpack.c.l.b16 %v685
    %v961 = vunpack.c.h.b16 %v685
    %v962 = vunpack.c.l.b16 %v686
    %v963 = vunpack.c.h.b16 %v686
    %v964 = vunpack.c.l.b16 %v687
    %v965 = vunpack.c.h.b16 %v687
    %v966 = vunpack.c.l.b16 %v688
    %v967 = vunpack.c.h.b16 %v688
    %v968 = vunpack.c.l.b16 %v689
    %v969 = vunpack.c.h.b16 %v689
    %v970 = vunpack.c.l.b16 %v690
    %v971 = vunpack.c.h.b16 %v690
    %v972 = vunpack.c.l.b16 %v691
    %v973 = vunpack.c.h.b16 %v691
    %v974 = vunpack.c.l.b16 %v692
    %v975 = vunpack.c.h.b16 %v692
    %v976 = vunpack.c.l.b16 %v693
    %v977 = vunpack.c.h.b16 %v693
    %v978 = vunpack.c.l.b16 %v694
    %v979 = vunpack.c.h.b16 %v694
    %v980 = vunpack.c.l.b16 %v695
    %v981 = vunpack.c.h.b16 %v695
    %v982 = vunpack.c.l.b16 %v696
    %v983 = vunpack.c.h.b16 %v696
    %v984 = vunpack.c.l.b16 %v697
    %v985 = vunpack.c.h.b16 %v697
    %v986 = vunpack.c.l.b16 %v698
    %v987 = vunpack.c.h.b16 %v698
    %v988 = vunpack.c.l.b16 %v699
    %v989 = vunpack.c.h.b16 %v699
    %v990 = vunpack.c.l.b16 %v700
    %v991 = vunpack.c.h.b16 %v700
    %v992 = vunpack.c.l.b16 %v701
    %v993 = vunpack.c.h.b16 %v701
    %v994 = vunpack.c.l.b16 %v702
    %v995 = vunpack.c.h.b16 %v702
    %v996 = vunpack.c.l.b16 %v703
    %v997 = vunpack.c.h.b16 %v703
    %v998 = vunpack.c.l.b16 %v704
    %v999 = vunpack.c.h.b16 %v704
    %v1000 = vunpack.c.l.b16 %v705
    %v1001 = vunpack.c.h.b16 %v705
    %v1002 = vunpack.c.l.b16 %v706
    %v1003 = vunpack.c.h.b16 %v706
    %v1004 = vunpack.c.l.b16 %v707
    %v1005 = vunpack.c.h.b16 %v707
    %v1006 = vunpack.c.l.b16 %v708
    %v1007 = vunpack.c.h.b16 %v708
    %v1008 = vunpack.c.l.b16 %v709
    %v1009 = vunpack.c.h.b16 %v709
    %v1010 = vunpack.c.l.b16 %v710
    %v1011 = vunpack.c.h.b16 %v710
    %v1012 = vunpack.c.l.b16 %v711
    %v1013 = vunpack.c.h.b16 %v711
    %v1014 = vunpack.c.l.b16 %v712
    %v1015 = vunpack.c.h.b16 %v712
    %v1016 = vunpack.c.l.b16 %v713
    %v1017 = vunpack.c.h.b16 %v713
    %v1018 = vpack.c.b16 %v956, %v954
    %v1019 = vpack.c.b16 %v957, %v955
    %v1020 = vpack.c.b16 %v960, %v958
    %v1021 = vpack.c.b16 %v961, %v959
    %v1022 = vpack.c.b16 %v964, %v962
    %v1023 = vpack.c.b16 %v965, %v963
    %v1024 = vpack.c.b16 %v968, %v966
    %v1025 = vpack.c.b16 %v969, %v967
    %v1026 = vpack.c.b16 %v972, %v970
    %v1027 = vpack.c.b16 %v973, %v971
    %v1028 = vpack.c.b16 %v976, %v974
    %v1029 = vpack.c.b16 %v977, %v975
    %v1030 = vpack.c.b16 %v980, %v978
    %v1031 = vpack.c.b16 %v981, %v979
    %v1032 = vpack.c.b16 %v984, %v982
    %v1033 = vpack.c.b16 %v985, %v983
    %v1034 = vpack.c.b16 %v988, %v986
    %v1035 = vpack.c.b16 %v989, %v987
    %v1036 = vpack.c.b16 %v992, %v990
    %v1037 = vpack.c.b16 %v993, %v991
    %v1038 = vpack.c.b16 %v996, %v994
    %v1039 = vpack.c.b16 %v997, %v995
    %v1040 = vpack.c.b16 %v1000, %v998
    %v1041 = vpack.c.b16 %v1001, %v999
    %v1042 = vpack.c.b16 %v1004, %v1002
    %v1043 = vpack.c.b16 %v1005, %v1003
    %v1044 = vpack.c.b16 %v1008, %v1006
    %v1045 = vpack.c.b16 %v1009, %v1007
    %v1046 = vpack.c.b16 %v1012, %v1010
    %v1047 = vpack.c.b16 %v1013, %v1011
    %v1048 = vpack.c.b16 %v1016, %v1014
    %v1049 = vpack.c.b16 %v1017, %v1015
    %1082 = vmatprep.subr.bf16.mxu0 0
    %1083 = vmatpush1.bf16.msra.mxu0 %v721
    %1084 = vmatprep.subr.bf16.mxu0 0
    %1085 = vmatpush1.bf16.msra.mxu0 %v720
    %1086 = vmatprep.subr.bf16.mxu0 0
    %1087 = vmatpush1.bf16.msra.mxu0 %v719
    %1088 = vmatprep.subr.bf16.mxu0 0
    %1089 = vmatpush1.bf16.msra.mxu0 %v718
    %1090 = vmatprep.subr.bf16.mxu0 0
    %1091 = vmatpush1.bf16.msra.mxu0 %v717
    %1092 = vmatprep.subr.bf16.mxu0 0
    %1093 = vmatpush1.bf16.msra.mxu0 %v716
    %1094 = vmatprep.subr.bf16.mxu0 0
    %1095 = vmatpush1.bf16.msra.mxu0 %v715
    %1096 = vmatprep.subr.bf16.mxu0 0
    %1097 = vmatpush1.bf16.msra.mxu0 %v714
    %1098 = vmatprep.subr.bf16.mxu0 0
    %1099 = vmatpush2.bf16.msra.mxu0 %v729
    %1100 = vmatprep.subr.bf16.mxu0 0
    %1101 = vmatpush2.bf16.msra.mxu0 %v728
    %1102 = vmatprep.subr.bf16.mxu0 0
    %1103 = vmatpush2.bf16.msra.mxu0 %v727
    %1104 = vmatprep.subr.bf16.mxu0 0
    %1105 = vmatpush2.bf16.msra.mxu0 %v726
    %1106 = vmatprep.subr.bf16.mxu0 0
    %1107 = vmatpush2.bf16.msra.mxu0 %v725
    %1108 = vmatprep.subr.bf16.mxu0 0
    %1109 = vmatpush2.bf16.msra.mxu0 %v724
    %1110 = vmatprep.subr.bf16.mxu0 0
    %1111 = vmatpush2.bf16.msra.mxu0 %v723
    %1112 = vmatprep.subr.bf16.mxu0 0
    %1113 = vmatpush2.bf16.msra.mxu0 %v722
    %1114 = vmatprep.mubr.bf16.mxu0 %v1019
    %1115 = vmatmul.mubr.bf16.gmra.mxu0 %v1018
    %v1116 = vpop.f32.mrf.mxu0
    %v1117 = vadd.f32 %v765, %v1116
    %v1118 = vpop.f32.mrf.mxu0
    %v1119 = vpop.f32.mrf.mxu0
    %v1120 = vadd.f32 %v770, %v1119
    %v1121 = vpop.f32.mrf.mxu0
    %1122 = vmatprep.mubr.bf16.mxu0 %v1021
    %1123 = vmatmul.mubr.bf16.gmra.mxu0 %v1020
    %v1124 = vpop.f32.mrf.mxu0
    %v1125 = vadd.f32 %v775, %v1124
    %v1126 = vpop.f32.mrf.mxu0
    %v1127 = vpop.f32.mrf.mxu0
    %v1128 = vadd.f32 %v780, %v1127
    %v1129 = vpop.f32.mrf.mxu0
    %1130 = vmatprep.mubr.bf16.mxu0 %v1023
    %1131 = vmatmul.mubr.bf16.gmra.mxu0 %v1022
    %v1132 = vpop.f32.mrf.mxu0
    %v1133 = vadd.f32 %v785, %v1132
    %v1134 = vpop.f32.mrf.mxu0
    %v1135 = vpop.f32.mrf.mxu0
    %v1136 = vadd.f32 %v790, %v1135
    %v1137 = vpop.f32.mrf.mxu0
    %1138 = vmatprep.mubr.bf16.mxu0 %v1025
    %1139 = vmatmul.mubr.bf16.gmra.mxu0 %v1024
    %v1140 = vpop.f32.mrf.mxu0
    %v1141 = vadd.f32 %v795, %v1140
    %v1142 = vpop.f32.mrf.mxu0
    %v1143 = vpop.f32.mrf.mxu0
    %v1144 = vadd.f32 %v800, %v1143
    %v1145 = vpop.f32.mrf.mxu0
    %1146 = vmatprep.mubr.bf16.mxu0 %v1027
    %1147 = vmatmul.mubr.bf16.gmra.mxu0 %v1026
    %v1148 = vpop.f32.mrf.mxu0
    %v1149 = vadd.f32 %v805, %v1148
    %v1150 = vpop.f32.mrf.mxu0
    %v1151 = vpop.f32.mrf.mxu0
    %v1152 = vadd.f32 %v810, %v1151
    %v1153 = vpop.f32.mrf.mxu0
    %1154 = vmatprep.mubr.bf16.mxu0 %v1029
    %1155 = vmatmul.mubr.bf16.gmra.mxu0 %v1028
    %v1156 = vpop.f32.mrf.mxu0
    %v1157 = vadd.f32 %v815, %v1156
    %v1158 = vpop.f32.mrf.mxu0
    %v1159 = vpop.f32.mrf.mxu0
    %v1160 = vadd.f32 %v820, %v1159
    %v1161 = vpop.f32.mrf.mxu0
    %1162 = vmatprep.mubr.bf16.mxu0 %v1031
    %1163 = vmatmul.mubr.bf16.gmra.mxu0 %v1030
    %v1164 = vpop.f32.mrf.mxu0
    %v1165 = vadd.f32 %v825, %v1164
    %v1166 = vpop.f32.mrf.mxu0
    %v1167 = vpop.f32.mrf.mxu0
    %v1168 = vadd.f32 %v830, %v1167
    %v1169 = vpop.f32.mrf.mxu0
    %1170 = vmatprep.mubr.bf16.mxu0 %v1033
    %1171 = vmatmul.mubr.bf16.gmra.mxu0 %v1032
    %v1172 = vpop.f32.mrf.mxu0
    %v1173 = vadd.f32 %v835, %v1172
    %v1174 = vpop.f32.mrf.mxu0
    %v1175 = vpop.f32.mrf.mxu0
    %v1176 = vadd.f32 %v840, %v1175
    %v1177 = vpop.f32.mrf.mxu0
    %1178 = vmatprep.mubr.bf16.mxu0 %v1035
    %1179 = vmatmul.mubr.bf16.gmra.mxu0 %v1034
    %v1180 = vpop.f32.mrf.mxu0
    %v1181 = vadd.f32 %v845, %v1180
    %v1182 = vpop.f32.mrf.mxu0
    %v1183 = vpop.f32.mrf.mxu0
    %v1184 = vadd.f32 %v850, %v1183
    %v1185 = vpop.f32.mrf.mxu0
    %1186 = vmatprep.mubr.bf16.mxu0 %v1037
    %1187 = vmatmul.mubr.bf16.gmra.mxu0 %v1036
    %v1188 = vpop.f32.mrf.mxu0
    %v1189 = vadd.f32 %v855, %v1188
    %v1190 = vpop.f32.mrf.mxu0
    %v1191 = vpop.f32.mrf.mxu0
    %v1192 = vadd.f32 %v860, %v1191
    %v1193 = vpop.f32.mrf.mxu0
    %1194 = vmatprep.mubr.bf16.mxu0 %v1039
    %1195 = vmatmul.mubr.bf16.gmra.mxu0 %v1038
    %v1196 = vpop.f32.mrf.mxu0
    %v1197 = vadd.f32 %v865, %v1196
    %v1198 = vpop.f32.mrf.mxu0
    %v1199 = vpop.f32.mrf.mxu0
    %v1200 = vadd.f32 %v870, %v1199
    %v1201 = vpop.f32.mrf.mxu0
    %1202 = vmatprep.mubr.bf16.mxu0 %v1041
    %1203 = vmatmul.mubr.bf16.gmra.mxu0 %v1040
    %v1204 = vpop.f32.mrf.mxu0
    %v1205 = vadd.f32 %v875, %v1204
    %v1206 = vpop.f32.mrf.mxu0
    %v1207 = vpop.f32.mrf.mxu0
    %v1208 = vadd.f32 %v880, %v1207
    %v1209 = vpop.f32.mrf.mxu0
    %1210 = vmatprep.mubr.bf16.mxu0 %v1043
    %1211 = vmatmul.mubr.bf16.gmra.mxu0 %v1042
    %v1212 = vpop.f32.mrf.mxu0
    %v1213 = vadd.f32 %v885, %v1212
    %v1214 = vpop.f32.mrf.mxu0
    %v1215 = vpop.f32.mrf.mxu0
    %v1216 = vadd.f32 %v890, %v1215
    %v1217 = vpop.f32.mrf.mxu0
    %1218 = vmatprep.mubr.bf16.mxu0 %v1045
    %1219 = vmatmul.mubr.bf16.gmra.mxu0 %v1044
    %v1220 = vpop.f32.mrf.mxu0
    %v1221 = vadd.f32 %v895, %v1220
    %v1222 = vpop.f32.mrf.mxu0
    %v1223 = vpop.f32.mrf.mxu0
    %v1224 = vadd.f32 %v900, %v1223
    %v1225 = vpop.f32.mrf.mxu0
    %1226 = vmatprep.mubr.bf16.mxu0 %v1047
    %1227 = vmatmul.mubr.bf16.gmra.mxu0 %v1046
    %v1228 = vpop.f32.mrf.mxu0
    %v1229 = vadd.f32 %v905, %v1228
    %v1230 = vpop.f32.mrf.mxu0
    %v1231 = vpop.f32.mrf.mxu0
    %v1232 = vadd.f32 %v910, %v1231
    %v1233 = vpop.f32.mrf.mxu0
    %1234 = vmatprep.mubr.bf16.mxu0 %v1049
    %1235 = vmatmul.mubr.bf16.gmra.mxu0 %v1048
    %v1236 = vpop.f32.mrf.mxu0
    %v1237 = vadd.f32 %v915, %v1236
    %v1238 = vpop.f32.mrf.mxu0
    %v1239 = vpop.f32.mrf.mxu0
    %v1240 = vadd.f32 %v920, %v1239
    %v1241 = vpop.f32.mrf.mxu0
    %1242 = vdwg.mxu0
    %v1243 = vmax.f32 %v1117, 0.0
    %v1244 = vmax.f32 %v1120, 0.0
    %v1245 = vmax.f32 %v1125, 0.0
    %v1246 = vmax.f32 %v1128, 0.0
    %v1247 = vmax.f32 %v1133, 0.0
    %v1248 = vmax.f32 %v1136, 0.0
    %v1249 = vmax.f32 %v1141, 0.0
    %v1250 = vmax.f32 %v1144, 0.0
    %v1251 = vmax.f32 %v1149, 0.0
    %v1252 = vmax.f32 %v1152, 0.0
    %v1253 = vmax.f32 %v1157, 0.0
    %v1254 = vmax.f32 %v1160, 0.0
    %v1255 = vmax.f32 %v1165, 0.0
    %v1256 = vmax.f32 %v1168, 0.0
    %v1257 = vmax.f32 %v1173, 0.0
    %v1258 = vmax.f32 %v1176, 0.0
    %v1259 = vmax.f32 %v1181, 0.0
    %v1260 = vmax.f32 %v1184, 0.0
    %v1261 = vmax.f32 %v1189, 0.0
    %v1262 = vmax.f32 %v1192, 0.0
    %v1263 = vmax.f32 %v1197, 0.0
    %v1264 = vmax.f32 %v1200, 0.0
    %v1265 = vmax.f32 %v1205, 0.0
    %v1266 = vmax.f32 %v1208, 0.0
    %v1267 = vmax.f32 %v1213, 0.0
    %v1268 = vmax.f32 %v1216, 0.0
    %v1269 = vmax.f32 %v1221, 0.0
    %v1270 = vmax.f32 %v1224, 0.0
    %v1271 = vmax.f32 %v1229, 0.0
    %v1272 = vmax.f32 %v1232, 0.0
    %v1273 = vmax.f32 %v1237, 0.0
    %v1274 = vmax.f32 %v1240, 0.0
    %v1275 = vld [vmem:[%s5] sm:$0xff]
    %v1276 = vld [vmem:[%s5 + $0x8] sm:$0xff]
    %v1277 = vld [vmem:[%s5 + $0x10] sm:$0xff]
    %v1278 = vld [vmem:[%s5 + $0x18] sm:$0xff]
    %v1279 = vld [vmem:[%s5 + $0x20] sm:$0xff]
    %v1280 = vld [vmem:[%s5 + $0x28] sm:$0xff]
    %v1281 = vld [vmem:[%s5 + $0x30] sm:$0xff]
    %v1282 = vld [vmem:[%s5 + $0x38] sm:$0xff]
    %v1283 = vld [vmem:[%s5 + $0x40] sm:$0xff]
    %v1284 = vld [vmem:[%s5 + $0x48] sm:$0xff]
    %v1285 = vld [vmem:[%s5 + $0x50] sm:$0xff]
    %v1286 = vld [vmem:[%s5 + $0x58] sm:$0xff]
    %v1287 = vld [vmem:[%s5 + $0x60] sm:$0xff]
    %v1288 = vld [vmem:[%s5 + $0x68] sm:$0xff]
    %v1289 = vld [vmem:[%s5 + $0x70] sm:$0xff]
    %v1290 = vld [vmem:[%s5 + $0x78] sm:$0xff]
    %v1291 = vld [vmem:[%s5 + $0x80] sm:$0xff]
    %v1292 = vld [vmem:[%s5 + $0x88] sm:$0xff]
    %v1293 = vld [vmem:[%s5 + $0x90] sm:$0xff]
    %v1294 = vld [vmem:[%s5 + $0x98] sm:$0xff]
    %v1295 = vld [vmem:[%s5 + $0xa0] sm:$0xff]
    %v1296 = vld [vmem:[%s5 + $0xa8] sm:$0xff]
    %v1297 = vld [vmem:[%s5 + $0xb0] sm:$0xff]
    %v1298 = vld [vmem:[%s5 + $0xb8] sm:$0xff]
    %v1299 = vld [vmem:[%s5 + $0xc0] sm:$0xff]
    %v1300 = vld [vmem:[%s5 + $0xc8] sm:$0xff]
    %v1301 = vld [vmem:[%s5 + $0xd0] sm:$0xff]
    %v1302 = vld [vmem:[%s5 + $0xd8] sm:$0xff]
    %v1303 = vld [vmem:[%s5 + $0xe0] sm:$0xff]
    %v1304 = vld [vmem:[%s5 + $0xe8] sm:$0xff]
    %v1305 = vld [vmem:[%s5 + $0xf0] sm:$0xff]
    %v1306 = vld [vmem:[%s5 + $0xf8] sm:$0xff]
    %1308 = vset.pattern.permute.xlu0 0
    %1309 = vperm.xlu0 %1308, %v1275
    %v1310 = vpop.permute.xlu0 %1309
    %1313 = vset.pattern.permute.xlu0 0
    %1314 = vperm.xlu0 %1313, %v1276
    %v1315 = vpop.permute.xlu0 %1314
    %1318 = vset.pattern.permute.xlu0 0
    %1319 = vperm.xlu0 %1318, %v1277
    %v1320 = vpop.permute.xlu0 %1319
    %1323 = vset.pattern.permute.xlu0 0
    %1324 = vperm.xlu0 %1323, %v1278
    %v1325 = vpop.permute.xlu0 %1324
    %1328 = vset.pattern.permute.xlu0 0
    %1329 = vperm.xlu0 %1328, %v1279
    %v1330 = vpop.permute.xlu0 %1329
    %1333 = vset.pattern.permute.xlu0 0
    %1334 = vperm.xlu0 %1333, %v1280
    %v1335 = vpop.permute.xlu0 %1334
    %1338 = vset.pattern.permute.xlu0 0
    %1339 = vperm.xlu0 %1338, %v1281
    %v1340 = vpop.permute.xlu0 %1339
    %1343 = vset.pattern.permute.xlu0 0
    %1344 = vperm.xlu0 %1343, %v1282
    %v1345 = vpop.permute.xlu0 %1344
    %1348 = vset.pattern.permute.xlu0 0
    %1349 = vperm.xlu0 %1348, %v1283
    %v1350 = vpop.permute.xlu0 %1349
    %1353 = vset.pattern.permute.xlu0 0
    %1354 = vperm.xlu0 %1353, %v1284
    %v1355 = vpop.permute.xlu0 %1354
    %1358 = vset.pattern.permute.xlu0 0
    %1359 = vperm.xlu0 %1358, %v1285
    %v1360 = vpop.permute.xlu0 %1359
    %1363 = vset.pattern.permute.xlu0 0
    %1364 = vperm.xlu0 %1363, %v1286
    %v1365 = vpop.permute.xlu0 %1364
    %1368 = vset.pattern.permute.xlu0 0
    %1369 = vperm.xlu0 %1368, %v1287
    %v1370 = vpop.permute.xlu0 %1369
    %1373 = vset.pattern.permute.xlu0 0
    %1374 = vperm.xlu0 %1373, %v1288
    %v1375 = vpop.permute.xlu0 %1374
    %1378 = vset.pattern.permute.xlu0 0
    %1379 = vperm.xlu0 %1378, %v1289
    %v1380 = vpop.permute.xlu0 %1379
    %1383 = vset.pattern.permute.xlu0 0
    %1384 = vperm.xlu0 %1383, %v1290
    %v1385 = vpop.permute.xlu0 %1384
    %1388 = vset.pattern.permute.xlu0 0
    %1389 = vperm.xlu0 %1388, %v1291
    %v1390 = vpop.permute.xlu0 %1389
    %1393 = vset.pattern.permute.xlu0 0
    %1394 = vperm.xlu0 %1393, %v1292
    %v1395 = vpop.permute.xlu0 %1394
    %1398 = vset.pattern.permute.xlu0 0
    %1399 = vperm.xlu0 %1398, %v1293
    %v1400 = vpop.permute.xlu0 %1399
    %1403 = vset.pattern.permute.xlu0 0
    %1404 = vperm.xlu0 %1403, %v1294
    %v1405 = vpop.permute.xlu0 %1404
    %1408 = vset.pattern.permute.xlu0 0
    %1409 = vperm.xlu0 %1408, %v1295
    %v1410 = vpop.permute.xlu0 %1409
    %1413 = vset.pattern.permute.xlu0 0
    %1414 = vperm.xlu0 %1413, %v1296
    %v1415 = vpop.permute.xlu0 %1414
    %1418 = vset.pattern.permute.xlu0 0
    %1419 = vperm.xlu0 %1418, %v1297
    %v1420 = vpop.permute.xlu0 %1419
    %1423 = vset.pattern.permute.xlu0 0
    %1424 = vperm.xlu0 %1423, %v1298
    %v1425 = vpop.permute.xlu0 %1424
    %1428 = vset.pattern.permute.xlu0 0
    %1429 = vperm.xlu0 %1428, %v1299
    %v1430 = vpop.permute.xlu0 %1429
    %1433 = vset.pattern.permute.xlu0 0
    %1434 = vperm.xlu0 %1433, %v1300
    %v1435 = vpop.permute.xlu0 %1434
    %1438 = vset.pattern.permute.xlu0 0
    %1439 = vperm.xlu0 %1438, %v1301
    %v1440 = vpop.permute.xlu0 %1439
    %1443 = vset.pattern.permute.xlu0 0
    %1444 = vperm.xlu0 %1443, %v1302
    %v1445 = vpop.permute.xlu0 %1444
    %1448 = vset.pattern.permute.xlu0 0
    %1449 = vperm.xlu0 %1448, %v1303
    %v1450 = vpop.permute.xlu0 %1449
    %1453 = vset.pattern.permute.xlu0 0
    %1454 = vperm.xlu0 %1453, %v1304
    %v1455 = vpop.permute.xlu0 %1454
    %1458 = vset.pattern.permute.xlu0 0
    %1459 = vperm.xlu0 %1458, %v1305
    %v1460 = vpop.permute.xlu0 %1459
    %1463 = vset.pattern.permute.xlu0 0
    %1464 = vperm.xlu0 %1463, %v1306
    %v1465 = vpop.permute.xlu0 %1464
    %v1467 = vmul.f32 %v1243, %v1310
    %v1468 = vmul.f32 %v1244, %v1315
    %v1469 = vmul.f32 %v1245, %v1320
    %v1470 = vmul.f32 %v1246, %v1325
    %v1471 = vmul.f32 %v1247, %v1330
    %v1472 = vmul.f32 %v1248, %v1335
    %v1473 = vmul.f32 %v1249, %v1340
    %v1474 = vmul.f32 %v1250, %v1345
    %v1475 = vmul.f32 %v1251, %v1350
    %v1476 = vmul.f32 %v1252, %v1355
    %v1477 = vmul.f32 %v1253, %v1360
    %v1478 = vmul.f32 %v1254, %v1365
    %v1479 = vmul.f32 %v1255, %v1370
    %v1480 = vmul.f32 %v1256, %v1375
    %v1481 = vmul.f32 %v1257, %v1380
    %v1482 = vmul.f32 %v1258, %v1385
    %v1483 = vmul.f32 %v1259, %v1390
    %v1484 = vmul.f32 %v1260, %v1395
    %v1485 = vmul.f32 %v1261, %v1400
    %v1486 = vmul.f32 %v1262, %v1405
    %v1487 = vmul.f32 %v1263, %v1410
    %v1488 = vmul.f32 %v1264, %v1415
    %v1489 = vmul.f32 %v1265, %v1420
    %v1490 = vmul.f32 %v1266, %v1425
    %v1491 = vmul.f32 %v1267, %v1430
    %v1492 = vmul.f32 %v1268, %v1435
    %v1493 = vmul.f32 %v1269, %v1440
    %v1494 = vmul.f32 %v1270, %v1445
    %v1495 = vmul.f32 %v1271, %v1450
    %v1496 = vmul.f32 %v1272, %v1455
    %v1497 = vmul.f32 %v1273, %v1460
    %v1498 = vmul.f32 %v1274, %v1465
    %v1499 = vadd.f32 %v1467, %v1468
    %v1500 = vadd.f32 %v1499, %v1469
    %v1501 = vadd.f32 %v1500, %v1470
    %v1502 = vadd.f32 %v1501, %v1471
    %v1503 = vadd.f32 %v1502, %v1472
    %v1504 = vadd.f32 %v1503, %v1473
    %v1505 = vadd.f32 %v1504, %v1474
    %v1506 = vadd.f32 %v1505, %v1475
    %v1507 = vadd.f32 %v1506, %v1476
    %v1508 = vadd.f32 %v1507, %v1477
    %v1509 = vadd.f32 %v1508, %v1478
    %v1510 = vadd.f32 %v1509, %v1479
    %v1511 = vadd.f32 %v1510, %v1480
    %v1512 = vadd.f32 %v1511, %v1481
    %v1513 = vadd.f32 %v1512, %v1482
    %v1514 = vadd.f32 %v1513, %v1483
    %v1515 = vadd.f32 %v1514, %v1484
    %v1516 = vadd.f32 %v1515, %v1485
    %v1517 = vadd.f32 %v1516, %v1486
    %v1518 = vadd.f32 %v1517, %v1487
    %v1519 = vadd.f32 %v1518, %v1488
    %v1520 = vadd.f32 %v1519, %v1489
    %v1521 = vadd.f32 %v1520, %v1490
    %v1522 = vadd.f32 %v1521, %v1491
    %v1523 = vadd.f32 %v1522, %v1492
    %v1524 = vadd.f32 %v1523, %v1493
    %v1525 = vadd.f32 %v1524, %v1494
    %v1526 = vadd.f32 %v1525, %v1495
    %v1527 = vadd.f32 %v1526, %v1496
    %v1528 = vadd.f32 %v1527, %v1497
    %v1529 = vadd.f32 %v1528, %v1498
    %v1530 = vrot.slane %v1529, 4
    %v1531 = vadd.f32 %v1529, %v1530
    %v1532 = vrot.slane %v1531, 2
    %v1533 = vadd.f32 %v1531, %v1532
    %v1534 = vrot.slane %v1533, 1
    %v1535 = vadd.f32 %v1533, %v1534
    %s1536 = sld [smem:[#allocation2]]
    %v1537 = vstv %s1536
    %v1538 = vadd.f32 %v1535, %v1537
    %1539 = vst [vmem:[#allocation3] sm:$0x1] %v1538
    // Predicated region
    $region30: #{tpu_custom_call.1} parent=1 // pred_check
      _
    $region31: #{tpu_custom_call.1} parent=1 // pred_check_branch
      %1541 = sbr.rel (0) target = $region33
    $region32: #{tpu_custom_call.1} parent=1 // pred_region
      %s1543 = ssub.s32 16, 16
      %1544 = vsyncadd [#allocation4], %s1543
      %s1546 = sshll.u32 [#allocation3], 4
      %s1547 = int_to_ptr.vmem [resolvable:$true] %s1546
      %1549 = dma.vmem_to_hbm [thread:$0]  %s1547, 16, %s7, [#allocation4]
    $region33: #{tpu_custom_call.1} parent=1 // pred_fallthru
      _
    // Predicated region
    $region34: #{tpu_custom_call.1} parent=1 // pred_check
      _
    $region35: #{tpu_custom_call.1} parent=1 // pred_check_branch
      %1551 = sbr.rel (0) target = $region37
    $region36: #{tpu_custom_call.1} parent=1 // pred_region
      %1552 = dma.done [#allocation4], 16
    $region37: #{tpu_custom_call.1} parent=1 // pred_fallthru
      _
    %1553 = vsyncpa [#allocation4], 1

</llo_original>
